<compile_context>
chip_gen: v6e
topology: v6e:2x2x1
jax: 0.10.0
libtpu: 0.0.40
codegen_flags: <defaults>
</compile_context>

<pallas_src>
import jax
import jax.numpy as jnp
from jax.experimental import pallas as pl
from jax.experimental.pallas import tpu as pltpu

K_IN = 28 * 28          # 784 (no K padding in HBM; Mosaic pads the contraction dim in VMEM)
H1, H2 = 128, 64
N_OUT = 10
N_OUT_PAD = 128         # lane-dense padded output width


def mlp_kernel(x_ref, w1_ref, b1_ref, w2_ref, b2_ref, w3_ref, b3_ref, o_ref):
    # f32 -> bf16 cast inside the kernel (free on the VPU, hidden under the x DMA)
    x = x_ref[...].astype(w1_ref.dtype)
    # fc1 + relu (bf16 MXU matmul, f32 accumulate; bias/ReLU in f32 -> v5e-safe)
    h1 = jnp.dot(x, w1_ref[...], preferred_element_type=jnp.float32)
    h1 = jnp.maximum(h1 + b1_ref[...], 0.0)
    # fc2 + relu
    h2 = jnp.dot(h1.astype(w2_ref.dtype), w2_ref[...],
                 preferred_element_type=jnp.float32)
    h2 = jnp.maximum(h2 + b2_ref[...], 0.0)
    # fc3 (logits, lane-padded to 128, stored bf16; no activation)
    out = jnp.dot(h2.astype(w3_ref.dtype), w3_ref[...],
                  preferred_element_type=jnp.float32)
    o_ref[...] = (out + b3_ref[...]).astype(o_ref.dtype)


def _round_up(n, m):
    return ((n + m - 1) // m) * m


def _cdiv(a, b):
    return (a + b - 1) // b


def _choose_batch_tile(B, max_tb=1024, min_grid_for_megacore=2):
    """Pick TB (multiple of 16) dividing the batch nearly evenly.

    - Caps TB at max_tb (mem-bound: bigger tiles amortize the ~0.35 us/step
      grid overhead; 1024 stays ~7 MiB VMEM, within every generation's limit).
    - When B is large enough, forces >= 2 grid steps so the "parallel" batch
      axis can shard across v7x's two TensorCores.
    - Chooses TB ~ B / n_tiles so batch-pad waste is < 1 tile.
    """
    n_tiles = _cdiv(B, max_tb)
    if B >= 2 * 16:
        n_tiles = max(n_tiles, min_grid_for_megacore)
    tb = _round_up(_cdiv(B, n_tiles), 16)
    b_pad = _round_up(B, tb)
    return tb, b_pad


def prepare_params(params, compute_dtype=jnp.bfloat16):
    """One-time parameter preprocessing (hoisted out of the forward path)."""
    w1, b1, w2, b2, w3, b3 = params
    w1p = w1.astype(compute_dtype)                                        # (784, 128)
    w2p = w2.astype(compute_dtype)                                        # (128, 64)
    w3p = jnp.pad(w3, ((0, 0), (0, N_OUT_PAD - N_OUT))).astype(compute_dtype)  # (64, 128)
    b1p = b1.astype(jnp.float32)                                          # (1, 128)
    b2p = b2.astype(jnp.float32)                                          # (1, 64)
    b3p = jnp.pad(b3, ((0, 0), (0, N_OUT_PAD - N_OUT))).astype(jnp.float32)    # (1, 128)
    return w1p, b1p, w2p, b2p, w3p, b3p


def net_forward(x_nchw, prepared_params, *, max_tb=1024, x_buffer_count=None):
    """x_nchw: (B, 1, 28, 28) float32 -> logits (B, 10) float32."""
    w1p, b1p, w2p, b2p, w3p, b3p = prepared_params
    B = x_nchw.shape[0]
    x = x_nchw.reshape(B, K_IN)  # torch: x.view(-1, 28*28); no-copy reshape

    TB, B_pad = _choose_batch_tile(B, max_tb=max_tb)
    if B_pad != B:
        # Only pads the (rare) ragged tail tile; no dtype change, no K pad.
        x = jnp.pad(x, ((0, B_pad - B), (0, 0)))

    grid = (B_pad // TB,)

    def resident(shape):
        # Weights/biases: same block every grid step -> DMA'd once, stay VMEM-resident.
        return pl.BlockSpec(shape, lambda i: (0,) * len(shape))

    # Optional deeper pipelining for the x stream (sweep Buffered(3) on v7x).
    x_kwargs = {}
    if x_buffer_count is not None:
        x_kwargs["pipeline_mode"] = pl.Buffered(x_buffer_count)

    out = pl.pallas_call(
        mlp_kernel,
        out_shape=jax.ShapeDtypeStruct((B_pad, N_OUT_PAD), jnp.bfloat16),
        grid=grid,
        in_specs=[
            pl.BlockSpec((TB, K_IN), lambda i: (i, 0), **x_kwargs),  # x: tiled over batch
            resident(w1p.shape), resident(b1p.shape),
            resident(w2p.shape), resident(b2p.shape),
            resident(w3p.shape), resident(b3p.shape),
        ],
        out_specs=pl.BlockSpec((TB, N_OUT_PAD), lambda i: (i, 0)),
        compiler_params=pltpu.CompilerParams(
            dimension_semantics=("parallel",),
        ),
    )(x, w1p, b1p, w2p, b2p, w3p, b3p)

    # Tiny slice + upcast (10 lanes per row) outside the kernel.
    return out[:B, :N_OUT].astype(jnp.float32)


def init_params(key):
    """Deterministic init mimicking torch.nn.Linear default: U(-1/sqrt(fan_in), 1/sqrt(fan_in))."""
    def linear(key, fan_in, fan_out):
        kw, kb = jax.random.split(key)
        bound = 1.0 / jnp.sqrt(fan_in)
        # stored already transposed: (fan_in, fan_out) so the kernel does x @ W
        w = jax.random.uniform(kw, (fan_in, fan_out), jnp.float32, -bound, bound)
        b = jax.random.uniform(kb, (1, fan_out), jnp.float32, -bound, bound)
        return w, b

    k1, k2, k3 = jax.random.split(key, 3)
    w1, b1 = linear(k1, K_IN, H1)
    w2, b2 = linear(k2, H1, H2)
    w3, b3 = linear(k3, H2, N_OUT)
    return (w1, b1, w2, b2, w3, b3)


def reference_forward(x_nchw, params, compute_dtype=jnp.bfloat16):
    """Pure-JAX reference doing the same bf16-input / f32-accumulate math."""
    w1, b1, w2, b2, w3, b3 = params
    x = x_nchw.reshape(x_nchw.shape[0], K_IN).astype(compute_dtype)
    h1 = jnp.dot(x, w1.astype(compute_dtype), preferred_element_type=jnp.float32)
    h1 = jnp.maximum(h1 + b1, 0.0)
    h2 = jnp.dot(h1.astype(compute_dtype), w2.astype(compute_dtype),
                 preferred_element_type=jnp.float32)
    h2 = jnp.maximum(h2 + b2, 0.0)
    out = jnp.dot(h2.astype(compute_dtype), w3.astype(compute_dtype),
                  preferred_element_type=jnp.float32) + b3
    # kernel stores logits in bf16; mirror that rounding
    return out.astype(jnp.bfloat16).astype(jnp.float32)


if __name__ == "__main__":
    key = jax.random.PRNGKey(0)
    k_params, k_x = jax.random.split(key)

    params = init_params(k_params)
    prepared = prepare_params(params)  # one-time param pad/cast (not per forward)

    # small batch of fake MNIST images, NCHW like the PyTorch DataLoader would yield
    x = jax.random.normal(k_x, (8, 1, 28, 28), jnp.float32)

    logits = net_forward(x, prepared)
    logits = jax.block_until_ready(logits)

    ref = reference_forward(x, params)
    assert logits.shape == (8, 10)
    assert jnp.allclose(logits, ref, atol=5e-2, rtol=5e-2), "mismatch vs pure-JAX reference"

    print("KERNEL_OK")
</pallas_src>

<mosaic_0001>
module attributes {stable_mosaic.version = 11 : i64} {
  func.func @mlp_kernel(%arg0: i32, %arg1: memref<16x784xf32, #tpu.memory_space<vmem>>, %arg2: memref<784x128xbf16, #tpu.memory_space<vmem>>, %arg3: memref<1x128xf32, #tpu.memory_space<vmem>>, %arg4: memref<128x64xbf16, #tpu.memory_space<vmem>>, %arg5: memref<1x64xf32, #tpu.memory_space<vmem>>, %arg6: memref<64x128xbf16, #tpu.memory_space<vmem>>, %arg7: memref<1x128xf32, #tpu.memory_space<vmem>>, %arg8: memref<16x128xbf16, #tpu.memory_space<vmem>>) attributes {dimension_semantics = [#tpu.dimension_semantics<parallel>], iteration_bounds = array<i64: 1>, scalar_prefetch = 0 : i64, scratch_operands = 0 : i64, tpu.core_type = #tpu.core_type<tc>, window_params = [{transform_indices = @transform_0, window_bounds = array<i64: 16, 784>}, {pipeline_mode = #tpu.pipeline_mode<synchronous>, transform_indices = @transform_1, window_bounds = array<i64: 784, 128>}, {pipeline_mode = #tpu.pipeline_mode<synchronous>, transform_indices = @transform_2, window_bounds = array<i64: 1, 128>}, {pipeline_mode = #tpu.pipeline_mode<synchronous>, transform_indices = @transform_3, window_bounds = array<i64: 128, 64>}, {pipeline_mode = #tpu.pipeline_mode<synchronous>, transform_indices = @transform_4, window_bounds = array<i64: 1, 64>}, {pipeline_mode = #tpu.pipeline_mode<synchronous>, transform_indices = @transform_5, window_bounds = array<i64: 64, 128>}, {pipeline_mode = #tpu.pipeline_mode<synchronous>, transform_indices = @transform_6, window_bounds = array<i64: 1, 128>}, {transform_indices = @transform_7, window_bounds = array<i64: 16, 128>}]} {
    %c0 = arith.constant 0 : index
    %c0_0 = arith.constant 0 : index
    %0 = vector.load %arg1[%c0, %c0_0] : memref<16x784xf32, #tpu.memory_space<vmem>>, vector<16x784xf32>
    %1 = arith.truncf %0 : vector<16x784xf32> to vector<16x784xbf16>
    %c0_1 = arith.constant 0 : index
    %c0_2 = arith.constant 0 : index
    %2 = vector.load %arg2[%c0_1, %c0_2] : memref<784x128xbf16, #tpu.memory_space<vmem>>, vector<784x128xbf16>
    %cst = arith.constant dense<0.000000e+00> : vector<16x128xf32>
    %3 = tpu.matmul %1, %2, %cst {dimension_numbers = #tpu.dot_dimension_numbers<[1], [0], [0], [1], [0, 0, 1, 1], [], []>} : vector<16x784xbf16>, vector<784x128xbf16>, vector<16x128xf32> -> vector<16x128xf32>
    %c0_3 = arith.constant 0 : index
    %c0_4 = arith.constant 0 : index
    %4 = vector.load %arg3[%c0_3, %c0_4] : memref<1x128xf32, #tpu.memory_space<vmem>>, vector<1x128xf32>
    %5 = vector.broadcast %4 : vector<1x128xf32> to vector<16x128xf32>
    %6 = arith.addf %3, %5 : vector<16x128xf32>
    %cst_5 = arith.constant 0.000000e+00 : f32
    %7 = vector.broadcast %cst_5 : f32 to vector<16x128xf32>
    %8 = arith.maximumf %6, %7 : vector<16x128xf32>
    %9 = arith.truncf %8 : vector<16x128xf32> to vector<16x128xbf16>
    %c0_6 = arith.constant 0 : index
    %c0_7 = arith.constant 0 : index
    %10 = vector.load %arg4[%c0_6, %c0_7] : memref<128x64xbf16, #tpu.memory_space<vmem>>, vector<128x64xbf16>
    %cst_8 = arith.constant dense<0.000000e+00> : vector<16x64xf32>
    %11 = tpu.matmul %9, %10, %cst_8 {dimension_numbers = #tpu.dot_dimension_numbers<[1], [0], [0], [1], [0, 0, 1, 1], [], []>} : vector<16x128xbf16>, vector<128x64xbf16>, vector<16x64xf32> -> vector<16x64xf32>
    %c0_9 = arith.constant 0 : index
    %c0_10 = arith.constant 0 : index
    %12 = vector.load %arg5[%c0_9, %c0_10] : memref<1x64xf32, #tpu.memory_space<vmem>>, vector<1x64xf32>
    %13 = vector.broadcast %12 : vector<1x64xf32> to vector<16x64xf32>
    %14 = arith.addf %11, %13 : vector<16x64xf32>
    %cst_11 = arith.constant 0.000000e+00 : f32
    %15 = vector.broadcast %cst_11 : f32 to vector<16x64xf32>
    %16 = arith.maximumf %14, %15 : vector<16x64xf32>
    %17 = arith.truncf %16 : vector<16x64xf32> to vector<16x64xbf16>
    %c0_12 = arith.constant 0 : index
    %c0_13 = arith.constant 0 : index
    %18 = vector.load %arg6[%c0_12, %c0_13] : memref<64x128xbf16, #tpu.memory_space<vmem>>, vector<64x128xbf16>
    %cst_14 = arith.constant dense<0.000000e+00> : vector<16x128xf32>
    %19 = tpu.matmul %17, %18, %cst_14 {dimension_numbers = #tpu.dot_dimension_numbers<[1], [0], [0], [1], [0, 0, 1, 1], [], []>} : vector<16x64xbf16>, vector<64x128xbf16>, vector<16x128xf32> -> vector<16x128xf32>
    %c0_15 = arith.constant 0 : index
    %c0_16 = arith.constant 0 : index
    %20 = vector.load %arg7[%c0_15, %c0_16] : memref<1x128xf32, #tpu.memory_space<vmem>>, vector<1x128xf32>
    %21 = vector.broadcast %20 : vector<1x128xf32> to vector<16x128xf32>
    %22 = arith.addf %19, %21 : vector<16x128xf32>
    %23 = arith.truncf %22 : vector<16x128xf32> to vector<16x128xbf16>
    %c0_17 = arith.constant 0 : index
    %c0_18 = arith.constant 0 : index
    %24 = vector.load %arg8[%c0_17, %c0_18] : memref<16x128xbf16, #tpu.memory_space<vmem>>, vector<16x128xbf16>
    tpu.vector_store %arg8[%c0_17, %c0_18], %23 {strides = array<i32>} : memref<16x128xbf16, #tpu.memory_space<vmem>>, vector<16x128xbf16>,
    return
  }
  func.func @transform_0(%arg0: i32) -> (i32, i32) {
    %c0_i32 = arith.constant 0 : i32
    %c0_i32_0 = arith.constant 0 : i32
    return %arg0, %c0_i32 : i32, i32
  }
  func.func @transform_1(%arg0: i32) -> (i32, i32) {
    %c0_i32 = arith.constant 0 : i32
    %c0_i32_0 = arith.constant 0 : i32
    %c0_i32_1 = arith.constant 0 : i32
    return %c0_i32, %c0_i32_0 : i32, i32
  }
  func.func @transform_2(%arg0: i32) -> (i32, i32) {
    %c0_i32 = arith.constant 0 : i32
    %c0_i32_0 = arith.constant 0 : i32
    %c0_i32_1 = arith.constant 0 : i32
    return %c0_i32, %c0_i32_0 : i32, i32
  }
  func.func @transform_3(%arg0: i32) -> (i32, i32) {
    %c0_i32 = arith.constant 0 : i32
    %c0_i32_0 = arith.constant 0 : i32
    %c0_i32_1 = arith.constant 0 : i32
    return %c0_i32, %c0_i32_0 : i32, i32
  }
  func.func @transform_4(%arg0: i32) -> (i32, i32) {
    %c0_i32 = arith.constant 0 : i32
    %c0_i32_0 = arith.constant 0 : i32
    %c0_i32_1 = arith.constant 0 : i32
    return %c0_i32, %c0_i32_0 : i32, i32
  }
  func.func @transform_5(%arg0: i32) -> (i32, i32) {
    %c0_i32 = arith.constant 0 : i32
    %c0_i32_0 = arith.constant 0 : i32
    %c0_i32_1 = arith.constant 0 : i32
    return %c0_i32, %c0_i32_0 : i32, i32
  }
  func.func @transform_6(%arg0: i32) -> (i32, i32) {
    %c0_i32 = arith.constant 0 : i32
    %c0_i32_0 = arith.constant 0 : i32
    %c0_i32_1 = arith.constant 0 : i32
    return %c0_i32, %c0_i32_0 : i32, i32
  }
  func.func @transform_7(%arg0: i32) -> (i32, i32) {
    %c0_i32 = arith.constant 0 : i32
    %c0_i32_0 = arith.constant 0 : i32
    return %arg0, %c0_i32 : i32, i32
  }
}

</mosaic_0001>

<llo_original>
// kernel: tpu_custom_call.1
$region0: #{tpu_custom_call.1}
  #allocation0 [shape = 'u32[]', space=smem, size = 0x4, offset = 0x4, fixed_abs, tag = 'smem constant byte address 0x4 - core index']
  #allocation1 [shape = 'u32[144,128]{1,0:T(1,128)}', space=vmem, size = 0x12000, scoped, tag = 'internal scratch']
  %s0 = inlined_call_operand.hbm [shape: f32[16,784], index: 0, kind: input, shape index: {}]
  %s1 = inlined_call_operand.hbm [shape: bf16[784,128], index: 1, kind: input, shape index: {}]
  %s2 = inlined_call_operand.vmem [shape: f32[1,128], index: 2, kind: input, shape index: {}]
  %s3 = inlined_call_operand.vmem [shape: bf16[128,64], index: 3, kind: input, shape index: {}]
  %s4 = inlined_call_operand.vmem [shape: f32[1,64], index: 4, kind: input, shape index: {}]
  %s5 = inlined_call_operand.vmem [shape: bf16[64,128], index: 5, kind: input, shape index: {}]
  %s6 = inlined_call_operand.vmem [shape: f32[1,128], index: 6, kind: input, shape index: {}]
  %s7 = inlined_call_operand.hbm [shape: bf16[16,128], index: 7, kind: output, shape index: {}]
  %s8 = sld [smem:[#allocation0]]
  $region46: #{tpu_custom_call.1} parent=0
    _
  %s10 = ssub.s32 1, %s8
  %s11 = scalar_select 0, %s10, %s8
  $region1: #{tpu_custom_call.1} parent=0
    #allocation2 [shape = 'u8[57344]{0}', space=vmem, size = 0xe000, scoped, tag = 'input window, operand 0, single buffered']
    #allocation3 [shape = 's32[1]{0}', space=sflag, size = 0x4, scoped, tag = 'scoped memory for tpu_custom_call.1']
    #allocation4 [shape = 's32[1]{0}', space=sflag, size = 0x4, scoped, tag = 'scoped memory for tpu_custom_call.1']
    #allocation5 [shape = 'u8[200704]{0}', space=vmem, size = 0x31000, scoped, tag = 'input window, operand 1, single buffered']
    #allocation6 [shape = 's32[1]{0}', space=sflag, size = 0x4, scoped, tag = 'scoped memory for tpu_custom_call.1']
    #allocation7 [shape = 'u8[4096]{0}', space=vmem, size = 0x1000, scoped, tag = 'output window, operand 0, single buffered']
    %12 = vsyncpa [#allocation3], 0
    %13 = vsyncpa [#allocation6], 0
    %14 = vsyncpa [#allocation4], 0
    // Predicated region
    $region2: #{tpu_custom_call.1} parent=1 // pred_check
      _
    $region3: #{tpu_custom_call.1} parent=1 // pred_check_branch
      %16 = sbr.rel (0) target = $region5
    $region4: #{tpu_custom_call.1} parent=1 // pred_region
      %s18 = ssub.s32 1792, 1792
      %19 = vsyncadd [#allocation3], %s18
      %s20 = sshll.u32 [#allocation2], 4
      %s21 = int_to_ptr.vmem [resolvable:$true] %s20
      %26 = dma.hbm_to_vmem [thread:$0]  %s0, 1792, %s21, [#allocation3], 896, 896, 56
    $region5: #{tpu_custom_call.1} parent=1 // pred_fallthru
      _
    // Predicated region
    $region6: #{tpu_custom_call.1} parent=1 // pred_check
      _
    $region7: #{tpu_custom_call.1} parent=1 // pred_check_branch
      %28 = sbr.rel (0) target = $region9
    $region8: #{tpu_custom_call.1} parent=1 // pred_region
      %s30 = ssub.s32 6272, 6272
      %31 = vsyncadd [#allocation6], %s30
      %s32 = sshll.u32 [#allocation5], 4
      %s33 = int_to_ptr.vmem [resolvable:$true] %s32
      %38 = dma.hbm_to_vmem [thread:$0]  %s1, 6272, %s33, [#allocation6], 64, 64, 4
    $region9: #{tpu_custom_call.1} parent=1 // pred_fallthru
      _
    // Predicated region
    $region10: #{tpu_custom_call.1} parent=1 // pred_check
      _
    $region11: #{tpu_custom_call.1} parent=1 // pred_check_branch
      %40 = sbr.rel (0) target = $region13
    $region12: #{tpu_custom_call.1} parent=1 // pred_region
      _
    $region13: #{tpu_custom_call.1} parent=1 // pred_fallthru
      _
    // Predicated region
    $region14: #{tpu_custom_call.1} parent=1 // pred_check
      _
    $region15: #{tpu_custom_call.1} parent=1 // pred_check_branch
      %42 = sbr.rel (0) target = $region17
    $region16: #{tpu_custom_call.1} parent=1 // pred_region
      _
    $region17: #{tpu_custom_call.1} parent=1 // pred_fallthru
      _
    // Predicated region
    $region18: #{tpu_custom_call.1} parent=1 // pred_check
      _
    $region19: #{tpu_custom_call.1} parent=1 // pred_check_branch
      %44 = sbr.rel (0) target = $region21
    $region20: #{tpu_custom_call.1} parent=1 // pred_region
      _
    $region21: #{tpu_custom_call.1} parent=1 // pred_fallthru
      _
    // Predicated region
    $region22: #{tpu_custom_call.1} parent=1 // pred_check
      _
    $region23: #{tpu_custom_call.1} parent=1 // pred_check_branch
      %46 = sbr.rel (0) target = $region25
    $region24: #{tpu_custom_call.1} parent=1 // pred_region
      _
    $region25: #{tpu_custom_call.1} parent=1 // pred_fallthru
      _
    // Predicated region
    $region26: #{tpu_custom_call.1} parent=1 // pred_check
      _
    $region27: #{tpu_custom_call.1} parent=1 // pred_check_branch
      %48 = sbr.rel (0) target = $region29
    $region28: #{tpu_custom_call.1} parent=1 // pred_region
      _
    $region29: #{tpu_custom_call.1} parent=1 // pred_fallthru
      _
    // Predicated region
    $region30: #{tpu_custom_call.1} parent=1 // pred_check
      _
    $region31: #{tpu_custom_call.1} parent=1 // pred_check_branch
      %50 = sbr.rel (0) target = $region33
    $region32: #{tpu_custom_call.1} parent=1 // pred_region
      %51 = dma.done [#allocation3], 1792
    $region33: #{tpu_custom_call.1} parent=1 // pred_fallthru
      _
    // Predicated region
    $region34: #{tpu_custom_call.1} parent=1 // pred_check
      _
    $region35: #{tpu_custom_call.1} parent=1 // pred_check_branch
      %53 = sbr.rel (0) target = $region37
    $region36: #{tpu_custom_call.1} parent=1 // pred_region
      %54 = dma.done [#allocation6], 6272
    $region37: #{tpu_custom_call.1} parent=1 // pred_fallthru
      _
    %v56 = vld [vmem:[#allocation2] sm:$0xff]
    %v57 = vld [vmem:[#allocation2 + $0x8] sm:$0xff]
    %v58 = vld [vmem:[#allocation2 + $0x10] sm:$0xff]
    %v59 = vld [vmem:[#allocation2 + $0x18] sm:$0xff]
    %v60 = vld [vmem:[#allocation2 + $0x20] sm:$0xff]
    %v61 = vld [vmem:[#allocation2 + $0x28] sm:$0xff]
    %v62 = vld [vmem:[#allocation2 + $0x30] sm:$0xff]
    %v63 = vld [vmem:[#allocation2 + $0x38] sm:$0xff]
    %v64 = vld [vmem:[#allocation2 + $0x40] sm:$0xff]
    %v65 = vld [vmem:[#allocation2 + $0x48] sm:$0xff]
    %v66 = vld [vmem:[#allocation2 + $0x50] sm:$0xff]
    %v67 = vld [vmem:[#allocation2 + $0x58] sm:$0xff]
    %v68 = vld [vmem:[#allocation2 + $0x60] sm:$0xff]
    %v69 = vld [vmem:[#allocation2 + $0x68] sm:$0xff]
    %v70 = vpack.c.bf16 %v63, %v56
    %v71 = vpack.c.bf16 %v64, %v57
    %v72 = vpack.c.bf16 %v65, %v58
    %v73 = vpack.c.bf16 %v66, %v59
    %v74 = vpack.c.bf16 %v67, %v60
    %v75 = vpack.c.bf16 %v68, %v61
    %v76 = vpack.c.bf16 %v69, %v62
    %v77 = vld [vmem:[#allocation5] sm:$0xf]
    %v78 = vld [vmem:[#allocation5 + $0x4] sm:$0xf]
    %v79 = vld [vmem:[#allocation5 + $0x8] sm:$0xf]
    %v80 = vld [vmem:[#allocation5 + $0xc] sm:$0xf]
    %v81 = vld [vmem:[#allocation5 + $0x10] sm:$0xf]
    %v82 = vld [vmem:[#allocation5 + $0x14] sm:$0xf]
    %v83 = vld [vmem:[#allocation5 + $0x18] sm:$0xf]
    %v84 = vld [vmem:[#allocation5 + $0x1c] sm:$0xf]
    %v85 = vld [vmem:[#allocation5 + $0x20] sm:$0xf]
    %v86 = vld [vmem:[#allocation5 + $0x24] sm:$0xf]
    %v87 = vld [vmem:[#allocation5 + $0x28] sm:$0xf]
    %v88 = vld [vmem:[#allocation5 + $0x2c] sm:$0xf]
    %v89 = vld [vmem:[#allocation5 + $0x30] sm:$0xf]
    %v90 = vld [vmem:[#allocation5 + $0x34] sm:$0xf]
    %v91 = vld [vmem:[#allocation5 + $0x38] sm:$0xf]
    %v92 = vld [vmem:[#allocation5 + $0x3c] sm:$0xf]
    %v93 = vld [vmem:[#allocation5 + $0x40] sm:$0xf]
    %v94 = vld [vmem:[#allocation5 + $0x44] sm:$0xf]
    %v95 = vld [vmem:[#allocation5 + $0x48] sm:$0xf]
    %v96 = vld [vmem:[#allocation5 + $0x4c] sm:$0xf]
    %v97 = vld [vmem:[#allocation5 + $0x50] sm:$0xf]
    %v98 = vld [vmem:[#allocation5 + $0x54] sm:$0xf]
    %v99 = vld [vmem:[#allocation5 + $0x58] sm:$0xf]
    %v100 = vld [vmem:[#allocation5 + $0x5c] sm:$0xf]
    %v101 = vld [vmem:[#allocation5 + $0x60] sm:$0xf]
    %v102 = vld [vmem:[#allocation5 + $0x64] sm:$0xf]
    %v103 = vld [vmem:[#allocation5 + $0x68] sm:$0xf]
    %v104 = vld [vmem:[#allocation5 + $0x6c] sm:$0xf]
    %v105 = vld [vmem:[#allocation5 + $0x70] sm:$0xf]
    %v106 = vld [vmem:[#allocation5 + $0x74] sm:$0xf]
    %v107 = vld [vmem:[#allocation5 + $0x78] sm:$0xf]
    %v108 = vld [vmem:[#allocation5 + $0x7c] sm:$0xf]
    %v109 = vld [vmem:[#allocation5 + $0x80] sm:$0xf]
    %v110 = vld [vmem:[#allocation5 + $0x84] sm:$0xf]
    %v111 = vld [vmem:[#allocation5 + $0x88] sm:$0xf]
    %v112 = vld [vmem:[#allocation5 + $0x8c] sm:$0xf]
    %v113 = vld [vmem:[#allocation5 + $0x90] sm:$0xf]
    %v114 = vld [vmem:[#allocation5 + $0x94] sm:$0xf]
    %v115 = vld [vmem:[#allocation5 + $0x98] sm:$0xf]
    %v116 = vld [vmem:[#allocation5 + $0x9c] sm:$0xf]
    %v117 = vld [vmem:[#allocation5 + $0xa0] sm:$0xf]
    %v118 = vld [vmem:[#allocation5 + $0xa4] sm:$0xf]
    %v119 = vld [vmem:[#allocation5 + $0xa8] sm:$0xf]
    %v120 = vld [vmem:[#allocation5 + $0xac] sm:$0xf]
    %v121 = vld [vmem:[#allocation5 + $0xb0] sm:$0xf]
    %v122 = vld [vmem:[#allocation5 + $0xb4] sm:$0xf]
    %v123 = vld [vmem:[#allocation5 + $0xb8] sm:$0xf]
    %v124 = vld [vmem:[#allocation5 + $0xbc] sm:$0xf]
    %v125 = vld [vmem:[#allocation5 + $0xc0] sm:$0xf]
    %v126 = vld [vmem:[#allocation5 + $0xc4] sm:$0xf]
    %v127 = vld [vmem:[#allocation5 + $0xc8] sm:$0xf]
    %v128 = vld [vmem:[#allocation5 + $0xcc] sm:$0xf]
    %v129 = vld [vmem:[#allocation5 + $0xd0] sm:$0xf]
    %v130 = vld [vmem:[#allocation5 + $0xd4] sm:$0xf]
    %v131 = vld [vmem:[#allocation5 + $0xd8] sm:$0xf]
    %v132 = vld [vmem:[#allocation5 + $0xdc] sm:$0xf]
    %v133 = vld [vmem:[#allocation5 + $0xe0] sm:$0xf]
    %v134 = vld [vmem:[#allocation5 + $0xe4] sm:$0xf]
    %v135 = vld [vmem:[#allocation5 + $0xe8] sm:$0xf]
    %v136 = vld [vmem:[#allocation5 + $0xec] sm:$0xf]
    %v137 = vld [vmem:[#allocation5 + $0xf0] sm:$0xf]
    %v138 = vld [vmem:[#allocation5 + $0xf4] sm:$0xf]
    %v139 = vld [vmem:[#allocation5 + $0xf8] sm:$0xf]
    %v140 = vld [vmem:[#allocation5 + $0xfc] sm:$0xf]
    %v141 = vld [vmem:[#allocation5 + $0x100] sm:$0xf]
    %v142 = vld [vmem:[#allocation5 + $0x104] sm:$0xf]
    %v143 = vld [vmem:[#allocation5 + $0x108] sm:$0xf]
    %v144 = vld [vmem:[#allocation5 + $0x10c] sm:$0xf]
    %v145 = vld [vmem:[#allocation5 + $0x110] sm:$0xf]
    %v146 = vld [vmem:[#allocation5 + $0x114] sm:$0xf]
    %v147 = vld [vmem:[#allocation5 + $0x118] sm:$0xf]
    %v148 = vld [vmem:[#allocation5 + $0x11c] sm:$0xf]
    %v149 = vld [vmem:[#allocation5 + $0x120] sm:$0xf]
    %v150 = vld [vmem:[#allocation5 + $0x124] sm:$0xf]
    %v151 = vld [vmem:[#allocation5 + $0x128] sm:$0xf]
    %v152 = vld [vmem:[#allocation5 + $0x12c] sm:$0xf]
    %v153 = vld [vmem:[#allocation5 + $0x130] sm:$0xf]
    %v154 = vld [vmem:[#allocation5 + $0x134] sm:$0xf]
    %v155 = vld [vmem:[#allocation5 + $0x138] sm:$0xf]
    %v156 = vld [vmem:[#allocation5 + $0x13c] sm:$0xf]
    %v157 = vld [vmem:[#allocation5 + $0x140] sm:$0xf]
    %v158 = vld [vmem:[#allocation5 + $0x144] sm:$0xf]
    %v159 = vld [vmem:[#allocation5 + $0x148] sm:$0xf]
    %v160 = vld [vmem:[#allocation5 + $0x14c] sm:$0xf]
    %v161 = vld [vmem:[#allocation5 + $0x150] sm:$0xf]
    %v162 = vld [vmem:[#allocation5 + $0x154] sm:$0xf]
    %v163 = vld [vmem:[#allocation5 + $0x158] sm:$0xf]
    %v164 = vld [vmem:[#allocation5 + $0x15c] sm:$0xf]
    %v165 = vld [vmem:[#allocation5 + $0x160] sm:$0xf]
    %v166 = vld [vmem:[#allocation5 + $0x164] sm:$0xf]
    %v167 = vld [vmem:[#allocation5 + $0x168] sm:$0xf]
    %v168 = vld [vmem:[#allocation5 + $0x16c] sm:$0xf]
    %v169 = vld [vmem:[#allocation5 + $0x170] sm:$0xf]
    %v170 = vld [vmem:[#allocation5 + $0x174] sm:$0xf]
    %v171 = vld [vmem:[#allocation5 + $0x178] sm:$0xf]
    %v172 = vld [vmem:[#allocation5 + $0x17c] sm:$0xf]
    %v173 = vld [vmem:[#allocation5 + $0x180] sm:$0xf]
    %v174 = vld [vmem:[#allocation5 + $0x184] sm:$0xf]
    %v175 = vld [vmem:[%s2] sm:$0x1]
    %v177 = vlaneseq
    %v178 = vshrl.u32 %v177, 7
    %v179 = vsub.s32 0, %v178
    %v180 = vrot.slane %v175, %v179
    %v280 = vunpack.c.l.b16 %v77
    %v281 = vunpack.c.l.b16 %v78
    %v282 = vunpack.c.l.b16 %v79
    %v283 = vunpack.c.l.b16 %v80
    %v284 = vunpack.c.l.b16 %v81
    %v285 = vunpack.c.l.b16 %v82
    %v286 = vunpack.c.l.b16 %v83
    %v287 = vunpack.c.l.b16 %v84
    %v288 = vunpack.c.l.b16 %v85
    %v289 = vunpack.c.l.b16 %v86
    %v290 = vunpack.c.l.b16 %v87
    %v291 = vunpack.c.l.b16 %v88
    %v292 = vunpack.c.l.b16 %v89
    %v293 = vunpack.c.l.b16 %v90
    %v294 = vunpack.c.l.b16 %v91
    %v295 = vunpack.c.l.b16 %v92
    %v296 = vunpack.c.l.b16 %v93
    %v297 = vunpack.c.l.b16 %v94
    %v298 = vunpack.c.l.b16 %v95
    %v299 = vunpack.c.l.b16 %v96
    %v300 = vunpack.c.l.b16 %v97
    %v301 = vunpack.c.l.b16 %v98
    %v302 = vunpack.c.l.b16 %v99
    %v303 = vunpack.c.l.b16 %v100
    %v304 = vunpack.c.l.b16 %v101
    %v305 = vunpack.c.l.b16 %v102
    %v306 = vunpack.c.l.b16 %v103
    %v307 = vunpack.c.l.b16 %v104
    %v308 = vunpack.c.l.b16 %v105
    %v309 = vunpack.c.l.b16 %v106
    %v310 = vunpack.c.l.b16 %v107
    %v311 = vunpack.c.l.b16 %v108
    %v312 = vunpack.c.l.b16 %v109
    %v313 = vunpack.c.l.b16 %v110
    %v314 = vunpack.c.l.b16 %v111
    %v315 = vunpack.c.l.b16 %v112
    %v316 = vunpack.c.l.b16 %v113
    %v317 = vunpack.c.l.b16 %v114
    %v318 = vunpack.c.l.b16 %v115
    %v319 = vunpack.c.l.b16 %v116
    %v320 = vunpack.c.l.b16 %v117
    %v321 = vunpack.c.l.b16 %v118
    %v322 = vunpack.c.l.b16 %v119
    %v323 = vunpack.c.l.b16 %v120
    %v324 = vunpack.c.l.b16 %v121
    %v325 = vunpack.c.l.b16 %v122
    %v326 = vunpack.c.l.b16 %v123
    %v327 = vunpack.c.l.b16 %v124
    %v328 = vunpack.c.l.b16 %v125
    %v329 = vunpack.c.l.b16 %v126
    %v330 = vunpack.c.l.b16 %v127
    %v331 = vunpack.c.l.b16 %v128
    %v332 = vunpack.c.l.b16 %v129
    %v333 = vunpack.c.l.b16 %v130
    %v334 = vunpack.c.l.b16 %v131
    %v335 = vunpack.c.l.b16 %v132
    %v336 = vunpack.c.l.b16 %v133
    %v337 = vunpack.c.l.b16 %v134
    %v338 = vunpack.c.l.b16 %v135
    %v339 = vunpack.c.l.b16 %v136
    %v340 = vunpack.c.l.b16 %v137
    %v341 = vunpack.c.l.b16 %v138
    %v342 = vunpack.c.l.b16 %v139
    %v343 = vunpack.c.l.b16 %v140
    %v344 = vunpack.c.l.b16 %v141
    %v345 = vunpack.c.l.b16 %v142
    %v346 = vunpack.c.l.b16 %v143
    %v347 = vunpack.c.l.b16 %v144
    %v348 = vunpack.c.l.b16 %v145
    %v349 = vunpack.c.l.b16 %v146
    %v350 = vunpack.c.l.b16 %v147
    %v351 = vunpack.c.l.b16 %v148
    %v352 = vunpack.c.l.b16 %v149
    %v353 = vunpack.c.l.b16 %v150
    %v354 = vunpack.c.l.b16 %v151
    %v355 = vunpack.c.l.b16 %v152
    %v356 = vunpack.c.l.b16 %v153
    %v357 = vunpack.c.l.b16 %v154
    %v358 = vunpack.c.l.b16 %v155
    %v359 = vunpack.c.l.b16 %v156
    %v360 = vunpack.c.l.b16 %v157
    %v361 = vunpack.c.l.b16 %v158
    %v362 = vunpack.c.l.b16 %v159
    %v363 = vunpack.c.l.b16 %v160
    %v364 = vunpack.c.l.b16 %v161
    %v365 = vunpack.c.l.b16 %v162
    %v366 = vunpack.c.l.b16 %v163
    %v367 = vunpack.c.l.b16 %v164
    %v368 = vunpack.c.l.b16 %v165
    %v369 = vunpack.c.l.b16 %v166
    %v370 = vunpack.c.l.b16 %v167
    %v371 = vunpack.c.l.b16 %v168
    %v372 = vunpack.c.l.b16 %v169
    %v373 = vunpack.c.l.b16 %v170
    %v374 = vunpack.c.l.b16 %v171
    %v375 = vunpack.c.l.b16 %v172
    %v376 = vunpack.c.l.b16 %v173
    %v377 = vunpack.c.l.b16 %v174
    %v378 = vpack.c.b16 %v281, %v280
    %v379 = vpack.c.b16 %v283, %v282
    %v380 = vpack.c.b16 %v285, %v284
    %v381 = vpack.c.b16 %v287, %v286
    %v382 = vpack.c.b16 %v289, %v288
    %v383 = vpack.c.b16 %v291, %v290
    %v384 = vpack.c.b16 %v293, %v292
    %v385 = vpack.c.b16 %v295, %v294
    %v386 = vpack.c.b16 %v297, %v296
    %v387 = vpack.c.b16 %v299, %v298
    %v388 = vpack.c.b16 %v301, %v300
    %v389 = vpack.c.b16 %v303, %v302
    %v390 = vpack.c.b16 %v305, %v304
    %v391 = vpack.c.b16 %v307, %v306
    %v392 = vpack.c.b16 %v309, %v308
    %v393 = vpack.c.b16 %v311, %v310
    %v394 = vpack.c.b16 %v313, %v312
    %v395 = vpack.c.b16 %v315, %v314
    %v396 = vpack.c.b16 %v317, %v316
    %v397 = vpack.c.b16 %v319, %v318
    %v398 = vpack.c.b16 %v321, %v320
    %v399 = vpack.c.b16 %v323, %v322
    %v400 = vpack.c.b16 %v325, %v324
    %v401 = vpack.c.b16 %v327, %v326
    %v402 = vpack.c.b16 %v329, %v328
    %v403 = vpack.c.b16 %v331, %v330
    %v404 = vpack.c.b16 %v333, %v332
    %v405 = vpack.c.b16 %v335, %v334
    %v406 = vpack.c.b16 %v337, %v336
    %v407 = vpack.c.b16 %v339, %v338
    %v408 = vpack.c.b16 %v341, %v340
    %v409 = vpack.c.b16 %v343, %v342
    %v410 = vpack.c.b16 %v345, %v344
    %v411 = vpack.c.b16 %v347, %v346
    %v412 = vpack.c.b16 %v349, %v348
    %v413 = vpack.c.b16 %v351, %v350
    %v414 = vpack.c.b16 %v353, %v352
    %v415 = vpack.c.b16 %v355, %v354
    %v416 = vpack.c.b16 %v357, %v356
    %v417 = vpack.c.b16 %v359, %v358
    %v418 = vpack.c.b16 %v361, %v360
    %v419 = vpack.c.b16 %v363, %v362
    %v420 = vpack.c.b16 %v365, %v364
    %v421 = vpack.c.b16 %v367, %v366
    %v422 = vpack.c.b16 %v369, %v368
    %v423 = vpack.c.b16 %v371, %v370
    %v424 = vpack.c.b16 %v373, %v372
    %v425 = vpack.c.b16 %v375, %v374
    %v426 = vpack.c.b16 %v377, %v376
    %vm476 = vcmask 130048
    %v478 = vsel %vm476, %v76, 0
    %480 = vmatprep.subr.bf16.mxu0 0
    %481 = vmatpush1.bf16.msra.mxu0 %v385
    %482 = vmatprep.subr.bf16.mxu0 0
    %483 = vmatpush1.bf16.msra.mxu0 %v384
    %484 = vmatprep.subr.bf16.mxu0 0
    %485 = vmatpush1.bf16.msra.mxu0 %v383
    %486 = vmatprep.subr.bf16.mxu0 0
    %487 = vmatpush1.bf16.msra.mxu0 %v382
    %488 = vmatprep.subr.bf16.mxu0 0
    %489 = vmatpush1.bf16.msra.mxu0 %v381
    %490 = vmatprep.subr.bf16.mxu0 0
    %491 = vmatpush1.bf16.msra.mxu0 %v380
    %492 = vmatprep.subr.bf16.mxu0 0
    %493 = vmatpush1.bf16.msra.mxu0 %v379
    %494 = vmatprep.subr.bf16.mxu0 0
    %495 = vmatpush1.bf16.msra.mxu0 %v378
    %496 = vmatprep.subr.bf16.mxu0 0
    %497 = vmatpush2.bf16.msra.mxu0 %v393
    %498 = vmatprep.subr.bf16.mxu0 0
    %499 = vmatpush2.bf16.msra.mxu0 %v392
    %500 = vmatprep.subr.bf16.mxu0 0
    %501 = vmatpush2.bf16.msra.mxu0 %v391
    %502 = vmatprep.subr.bf16.mxu0 0
    %503 = vmatpush2.bf16.msra.mxu0 %v390
    %504 = vmatprep.subr.bf16.mxu0 0
    %505 = vmatpush2.bf16.msra.mxu0 %v389
    %506 = vmatprep.subr.bf16.mxu0 0
    %507 = vmatpush2.bf16.msra.mxu0 %v388
    %508 = vmatprep.subr.bf16.mxu0 0
    %509 = vmatpush2.bf16.msra.mxu0 %v387
    %510 = vmatprep.subr.bf16.mxu0 0
    %511 = vmatpush2.bf16.msra.mxu0 %v386
    %512 = vmatprep.mubr.bf16.mxu0 %v71
    %513 = vmatmul.mubr.bf16.gmra.mxu0 %v70
    %v514 = vpop.f32.mrf.mxu0
    %v515 = vadd.f32 %v180, %v514
    %v516 = vpop.f32.mrf.mxu0
    %v517 = vpop.f32.mrf.mxu0
    %v518 = vadd.f32 %v180, %v517
    %v519 = vpop.f32.mrf.mxu0
    %520 = vdwg.mxu0
    %521 = vmatprep.subr.bf16.mxu0 0
    %522 = vmatpush1.bf16.msra.mxu0 %v401
    %523 = vmatprep.subr.bf16.mxu0 0
    %524 = vmatpush1.bf16.msra.mxu0 %v400
    %525 = vmatprep.subr.bf16.mxu0 0
    %526 = vmatpush1.bf16.msra.mxu0 %v399
    %527 = vmatprep.subr.bf16.mxu0 0
    %528 = vmatpush1.bf16.msra.mxu0 %v398
    %529 = vmatprep.subr.bf16.mxu0 0
    %530 = vmatpush1.bf16.msra.mxu0 %v397
    %531 = vmatprep.subr.bf16.mxu0 0
    %532 = vmatpush1.bf16.msra.mxu0 %v396
    %533 = vmatprep.subr.bf16.mxu0 0
    %534 = vmatpush1.bf16.msra.mxu0 %v395
    %535 = vmatprep.subr.bf16.mxu0 0
    %536 = vmatpush1.bf16.msra.mxu0 %v394
    %537 = vmatprep.subr.bf16.mxu0 0
    %538 = vmatpush2.bf16.msra.mxu0 %v409
    %539 = vmatprep.subr.bf16.mxu0 0
    %540 = vmatpush2.bf16.msra.mxu0 %v408
    %541 = vmatprep.subr.bf16.mxu0 0
    %542 = vmatpush2.bf16.msra.mxu0 %v407
    %543 = vmatprep.subr.bf16.mxu0 0
    %544 = vmatpush2.bf16.msra.mxu0 %v406
    %545 = vmatprep.subr.bf16.mxu0 0
    %546 = vmatpush2.bf16.msra.mxu0 %v405
    %547 = vmatprep.subr.bf16.mxu0 0
    %548 = vmatpush2.bf16.msra.mxu0 %v404
    %549 = vmatprep.subr.bf16.mxu0 0
    %550 = vmatpush2.bf16.msra.mxu0 %v403
    %551 = vmatprep.subr.bf16.mxu0 0
    %552 = vmatpush2.bf16.msra.mxu0 %v402
    %553 = vmatprep.mubr.bf16.mxu0 %v73
    %554 = vmatmul.mubr.bf16.gmra.mxu0 %v72
    %v555 = vpop.f32.mrf.mxu0
    %v556 = vadd.f32 %v515, %v555
    %v557 = vpop.f32.mrf.mxu0
    %v558 = vpop.f32.mrf.mxu0
    %v559 = vadd.f32 %v518, %v558
    %v560 = vpop.f32.mrf.mxu0
    %561 = vdwg.mxu0
    %562 = vmatprep.subr.bf16.mxu0 0
    %563 = vmatpush1.bf16.msra.mxu0 %v417
    %564 = vmatprep.subr.bf16.mxu0 0
    %565 = vmatpush1.bf16.msra.mxu0 %v416
    %566 = vmatprep.subr.bf16.mxu0 0
    %567 = vmatpush1.bf16.msra.mxu0 %v415
    %568 = vmatprep.subr.bf16.mxu0 0
    %569 = vmatpush1.bf16.msra.mxu0 %v414
    %570 = vmatprep.subr.bf16.mxu0 0
    %571 = vmatpush1.bf16.msra.mxu0 %v413
    %572 = vmatprep.subr.bf16.mxu0 0
    %573 = vmatpush1.bf16.msra.mxu0 %v412
    %574 = vmatprep.subr.bf16.mxu0 0
    %575 = vmatpush1.bf16.msra.mxu0 %v411
    %576 = vmatprep.subr.bf16.mxu0 0
    %577 = vmatpush1.bf16.msra.mxu0 %v410
    %578 = vmatprep.subr.bf16.mxu0 0
    %579 = vmatpush2.bf16.msra.mxu0 %v425
    %580 = vmatprep.subr.bf16.mxu0 0
    %581 = vmatpush2.bf16.msra.mxu0 %v424
    %582 = vmatprep.subr.bf16.mxu0 0
    %583 = vmatpush2.bf16.msra.mxu0 %v423
    %584 = vmatprep.subr.bf16.mxu0 0
    %585 = vmatpush2.bf16.msra.mxu0 %v422
    %586 = vmatprep.subr.bf16.mxu0 0
    %587 = vmatpush2.bf16.msra.mxu0 %v421
    %588 = vmatprep.subr.bf16.mxu0 0
    %589 = vmatpush2.bf16.msra.mxu0 %v420
    %590 = vmatprep.subr.bf16.mxu0 0
    %591 = vmatpush2.bf16.msra.mxu0 %v419
    %592 = vmatprep.subr.bf16.mxu0 0
    %593 = vmatpush2.bf16.msra.mxu0 %v418
    %594 = vmatprep.mubr.bf16.mxu0 %v75
    %595 = vmatmul.mubr.bf16.gmra.mxu0 %v74
    %v596 = vpop.f32.mrf.mxu0
    %v597 = vadd.f32 %v556, %v596
    %v598 = vpop.f32.mrf.mxu0
    %v599 = vpop.f32.mrf.mxu0
    %v600 = vadd.f32 %v559, %v599
    %v601 = vpop.f32.mrf.mxu0
    %602 = vdwg.mxu0
    %603 = vmatprep.subr.bf16.mxu0 0
    %604 = vmatpush1.bf16.msra.mxu0 0
    %605 = vmatprep.subr.bf16.mxu0 0
    %606 = vmatpush1.bf16.msra.mxu0 0
    %607 = vmatprep.subr.bf16.mxu0 0
    %608 = vmatpush1.bf16.msra.mxu0 0
    %609 = vmatprep.subr.bf16.mxu0 0
    %610 = vmatpush1.bf16.msra.mxu0 0
    %611 = vmatprep.subr.bf16.mxu0 0
    %612 = vmatpush1.bf16.msra.mxu0 0
    %613 = vmatprep.subr.bf16.mxu0 0
    %614 = vmatpush1.bf16.msra.mxu0 0
    %615 = vmatprep.subr.bf16.mxu0 0
    %616 = vmatpush1.bf16.msra.mxu0 0
    %617 = vmatprep.subr.bf16.mxu0 0
    %618 = vmatpush1.bf16.msra.mxu0 %v426
    %619 = vmatprep.subr.bf16.mxu0 0
    %620 = vmatpush2.bf16.msra.mxu0 0
    %621 = vmatprep.subr.bf16.mxu0 0
    %622 = vmatpush2.bf16.msra.mxu0 0
    %623 = vmatprep.subr.bf16.mxu0 0
    %624 = vmatpush2.bf16.msra.mxu0 0
    %625 = vmatprep.subr.bf16.mxu0 0
    %626 = vmatpush2.bf16.msra.mxu0 0
    %627 = vmatprep.subr.bf16.mxu0 0
    %628 = vmatpush2.bf16.msra.mxu0 0
    %629 = vmatprep.subr.bf16.mxu0 0
    %630 = vmatpush2.bf16.msra.mxu0 0
    %631 = vmatprep.subr.bf16.mxu0 0
    %632 = vmatpush2.bf16.msra.mxu0 0
    %633 = vmatprep.subr.bf16.mxu0 0
    %634 = vmatpush2.bf16.msra.mxu0 0
    %635 = vmatprep.mubr.bf16.mxu0 0
    %636 = vmatmul.mubr.bf16.gmra.mxu0 %v478
    %v637 = vpop.f32.mrf.mxu0
    %v638 = vadd.f32 %v597, %v637
    %v639 = vpop.f32.mrf.mxu0
    %v640 = vpop.f32.mrf.mxu0
    %v641 = vadd.f32 %v600, %v640
    %v642 = vpop.f32.mrf.mxu0
    %643 = vdwg.mxu0
    %v644 = vmax.f32 %v638, 0.0
    %v645 = vmax.f32 %v641, 0.0
    %v646 = vpack.c.bf16 %v645, %v644
    %v647 = vld [vmem:[%s3] sm:$0xf]
    %v648 = vld [vmem:[%s3 + $0x4] sm:$0xf]
    %v649 = vld [vmem:[%s3 + $0x8] sm:$0xf]
    %v650 = vld [vmem:[%s3 + $0xc] sm:$0xf]
    %v651 = vld [vmem:[%s3 + $0x10] sm:$0xf]
    %v652 = vld [vmem:[%s3 + $0x14] sm:$0xf]
    %v653 = vld [vmem:[%s3 + $0x18] sm:$0xf]
    %v654 = vld [vmem:[%s3 + $0x1c] sm:$0xf]
    %v655 = vld [vmem:[%s3 + $0x20] sm:$0xf]
    %v656 = vld [vmem:[%s3 + $0x24] sm:$0xf]
    %v657 = vld [vmem:[%s3 + $0x28] sm:$0xf]
    %v658 = vld [vmem:[%s3 + $0x2c] sm:$0xf]
    %v659 = vld [vmem:[%s3 + $0x30] sm:$0xf]
    %v660 = vld [vmem:[%s3 + $0x34] sm:$0xf]
    %v661 = vld [vmem:[%s3 + $0x38] sm:$0xf]
    %v662 = vld [vmem:[%s3 + $0x3c] sm:$0xf]
    %v663 = vld [vmem:[%s4] sm:$0x1]
    %v665 = vlaneseq
    %v666 = vshrl.u32 %v665, 7
    %v667 = vsub.s32 0, %v666
    %v668 = vrot.slane %v663, %v667
    %v686 = vunpack.c.l.b16 %v647
    %v687 = vunpack.c.l.b16 %v648
    %v688 = vunpack.c.l.b16 %v649
    %v689 = vunpack.c.l.b16 %v650
    %v690 = vunpack.c.l.b16 %v651
    %v691 = vunpack.c.l.b16 %v652
    %v692 = vunpack.c.l.b16 %v653
    %v693 = vunpack.c.l.b16 %v654
    %v694 = vunpack.c.l.b16 %v655
    %v695 = vunpack.c.l.b16 %v656
    %v696 = vunpack.c.l.b16 %v657
    %v697 = vunpack.c.l.b16 %v658
    %v698 = vunpack.c.l.b16 %v659
    %v699 = vunpack.c.l.b16 %v660
    %v700 = vunpack.c.l.b16 %v661
    %v701 = vunpack.c.l.b16 %v662
    %v702 = vpack.c.b16 %v687, %v686
    %v703 = vpack.c.b16 %v689, %v688
    %v704 = vpack.c.b16 %v691, %v690
    %v705 = vpack.c.b16 %v693, %v692
    %v706 = vpack.c.b16 %v695, %v694
    %v707 = vpack.c.b16 %v697, %v696
    %v708 = vpack.c.b16 %v699, %v698
    %v709 = vpack.c.b16 %v701, %v700
    %718 = vmatprep.subr.bf16.mxu0 0
    %719 = vmatpush1.bf16.msra.mxu0 %v709
    %720 = vmatprep.subr.bf16.mxu0 0
    %721 = vmatpush1.bf16.msra.mxu0 %v708
    %722 = vmatprep.subr.bf16.mxu0 0
    %723 = vmatpush1.bf16.msra.mxu0 %v707
    %724 = vmatprep.subr.bf16.mxu0 0
    %725 = vmatpush1.bf16.msra.mxu0 %v706
    %726 = vmatprep.subr.bf16.mxu0 0
    %727 = vmatpush1.bf16.msra.mxu0 %v705
    %728 = vmatprep.subr.bf16.mxu0 0
    %729 = vmatpush1.bf16.msra.mxu0 %v704
    %730 = vmatprep.subr.bf16.mxu0 0
    %731 = vmatpush1.bf16.msra.mxu0 %v703
    %732 = vmatprep.subr.bf16.mxu0 0
    %733 = vmatpush1.bf16.msra.mxu0 %v702
    %734 = vmatprep.subr.bf16.mxu0 0
    %735 = vmatpush2.bf16.msra.mxu0 0
    %736 = vmatprep.subr.bf16.mxu0 0
    %737 = vmatpush2.bf16.msra.mxu0 0
    %738 = vmatprep.subr.bf16.mxu0 0
    %739 = vmatpush2.bf16.msra.mxu0 0
    %740 = vmatprep.subr.bf16.mxu0 0
    %741 = vmatpush2.bf16.msra.mxu0 0
    %742 = vmatprep.subr.bf16.mxu0 0
    %743 = vmatpush2.bf16.msra.mxu0 0
    %744 = vmatprep.subr.bf16.mxu0 0
    %745 = vmatpush2.bf16.msra.mxu0 0
    %746 = vmatprep.subr.bf16.mxu0 0
    %747 = vmatpush2.bf16.msra.mxu0 0
    %748 = vmatprep.subr.bf16.mxu0 0
    %749 = vmatpush2.bf16.msra.mxu0 0
    %750 = vmatprep.mubr.bf16.mxu0 0
    %751 = vmatmul.mubr.bf16.gmra.mxu0 %v646
    %v752 = vpop.f32.mrf.mxu0
    %v753 = vadd.f32 %v668, %v752
    %v754 = vpop.f32.mrf.mxu0
    %v755 = vpop.f32.mrf.mxu0
    %v756 = vadd.f32 %v668, %v755
    %v757 = vpop.f32.mrf.mxu0
    %758 = vdwg.mxu0
    %v759 = vmax.f32 %v753, 0.0
    %v760 = vmax.f32 %v756, 0.0
    %v761 = vpack.c.bf16 %v760, %v759
    %v762 = vld [vmem:[%s5] sm:$0xf]
    %v763 = vld [vmem:[%s5 + $0x4] sm:$0xf]
    %v764 = vld [vmem:[%s5 + $0x8] sm:$0xf]
    %v765 = vld [vmem:[%s5 + $0xc] sm:$0xf]
    %v766 = vld [vmem:[%s5 + $0x10] sm:$0xf]
    %v767 = vld [vmem:[%s5 + $0x14] sm:$0xf]
    %v768 = vld [vmem:[%s5 + $0x18] sm:$0xf]
    %v769 = vld [vmem:[%s5 + $0x1c] sm:$0xf]
    %v770 = vld [vmem:[%s6] sm:$0x1]
    %v772 = vlaneseq
    %v773 = vshrl.u32 %v772, 7
    %v774 = vsub.s32 0, %v773
    %v775 = vrot.slane %v770, %v774
    %v785 = vunpack.c.l.b16 %v762
    %v786 = vunpack.c.l.b16 %v763
    %v787 = vunpack.c.l.b16 %v764
    %v788 = vunpack.c.l.b16 %v765
    %v789 = vunpack.c.l.b16 %v766
    %v790 = vunpack.c.l.b16 %v767
    %v791 = vunpack.c.l.b16 %v768
    %v792 = vunpack.c.l.b16 %v769
    %v793 = vpack.c.b16 %v786, %v785
    %v794 = vpack.c.b16 %v788, %v787
    %v795 = vpack.c.b16 %v790, %v789
    %v796 = vpack.c.b16 %v792, %v791
    %vm801 = vcmask 523264
    %v803 = vsel %vm801, %v761, 0
    %805 = vmatprep.subr.bf16.mxu0 0
    %806 = vmatpush1.bf16.msra.mxu0 0
    %807 = vmatprep.subr.bf16.mxu0 0
    %808 = vmatpush1.bf16.msra.mxu0 0
    %809 = vmatprep.subr.bf16.mxu0 0
    %810 = vmatpush1.bf16.msra.mxu0 0
    %811 = vmatprep.subr.bf16.mxu0 0
    %812 = vmatpush1.bf16.msra.mxu0 0
    %813 = vmatprep.subr.bf16.mxu0 0
    %814 = vmatpush1.bf16.msra.mxu0 %v796
    %815 = vmatprep.subr.bf16.mxu0 0
    %816 = vmatpush1.bf16.msra.mxu0 %v795
    %817 = vmatprep.subr.bf16.mxu0 0
    %818 = vmatpush1.bf16.msra.mxu0 %v794
    %819 = vmatprep.subr.bf16.mxu0 0
    %820 = vmatpush1.bf16.msra.mxu0 %v793
    %821 = vmatprep.subr.bf16.mxu0 0
    %822 = vmatpush2.bf16.msra.mxu0 0
    %823 = vmatprep.subr.bf16.mxu0 0
    %824 = vmatpush2.bf16.msra.mxu0 0
    %825 = vmatprep.subr.bf16.mxu0 0
    %826 = vmatpush2.bf16.msra.mxu0 0
    %827 = vmatprep.subr.bf16.mxu0 0
    %828 = vmatpush2.bf16.msra.mxu0 0
    %829 = vmatprep.subr.bf16.mxu0 0
    %830 = vmatpush2.bf16.msra.mxu0 0
    %831 = vmatprep.subr.bf16.mxu0 0
    %832 = vmatpush2.bf16.msra.mxu0 0
    %833 = vmatprep.subr.bf16.mxu0 0
    %834 = vmatpush2.bf16.msra.mxu0 0
    %835 = vmatprep.subr.bf16.mxu0 0
    %836 = vmatpush2.bf16.msra.mxu0 0
    %837 = vmatprep.mubr.bf16.mxu0 0
    %838 = vmatmul.mubr.bf16.gmra.mxu0 %v803
    %v839 = vpop.f32.mrf.mxu0
    %v840 = vadd.f32 %v775, %v839
    %v841 = vpop.f32.mrf.mxu0
    %v842 = vpop.f32.mrf.mxu0
    %v843 = vadd.f32 %v775, %v842
    %v844 = vpop.f32.mrf.mxu0
    %845 = vdwg.mxu0
    %v846 = vpack.c.bf16 %v843, %v840
    %v848 = vunpack.c.l.b16 %v846
    %v849 = vunpack.c.h.b16 %v846
    %v850 = vpack.c.b16 %v848, %v848
    %v851 = vpack.c.b16 %v849, %v849
    %854 = vst [vmem:[#allocation7] sm:$0xf] %v850
    %855 = vst [vmem:[#allocation7 + $0x4] sm:$0xf] %v851
    // Predicated region
    $region38: #{tpu_custom_call.1} parent=1 // pred_check
      _
    $region39: #{tpu_custom_call.1} parent=1 // pred_check_branch
      %857 = sbr.rel (0) target = $region41
    $region40: #{tpu_custom_call.1} parent=1 // pred_region
      %s859 = ssub.s32 128, 128
      %860 = vsyncadd [#allocation4], %s859
      %s861 = sshll.u32 [#allocation7], 4
      %s862 = int_to_ptr.vmem [resolvable:$true] %s861
      %867 = dma.vmem_to_hbm [thread:$0]  %s862, 128, %s7, [#allocation4], 64, 64, 4
    $region41: #{tpu_custom_call.1} parent=1 // pred_fallthru
      _
    // Predicated region
    $region42: #{tpu_custom_call.1} parent=1 // pred_check
      _
    $region43: #{tpu_custom_call.1} parent=1 // pred_check_branch
      %869 = sbr.rel (0) target = $region45
    $region44: #{tpu_custom_call.1} parent=1 // pred_region
      %870 = dma.done [#allocation4], 128
    $region45: #{tpu_custom_call.1} parent=1 // pred_fallthru
      _
    %871 = vsyncpa [#allocation3], 1
    %872 = vsyncpa [#allocation6], 1
    %873 = vsyncpa [#allocation4], 1

</llo_original>
